<compile_context>
chip_gen: v7x
topology: tpu7x:2x2x1
jax: 0.10.0
libtpu: 0.0.40
codegen_flags: <defaults>
</compile_context>

<pallas_src>
import math

import jax
import jax.numpy as jnp
from jax.experimental import pallas as pl
from jax.experimental.pallas import tpu as pltpu

D_IN = 186   # fc1 in_features
D_HID = 186  # fc1 out_features
D_OUT = 168  # fc2 out_features

# Batch tile: 2048 rows amortizes the ~0.35 us per-step overhead on all gens
# (v7x's 3.2 TB/s/TC especially) while keeping the double-buffered f32 x-tile
# (+ f32 out-tile + resident bf16 fused weight) around ~6 MiB of VMEM — well
# under v5e's 16 MiB scoped default, v6e's 32 MiB and v7x's 64 MiB physical.
TB_MAX = 2048


def fused_mlp_kernel(x_ref, w_ref, b_ref, o_ref):
    # Cast the f32 batch tile to bf16 in-kernel (VPU cast hides under DMA),
    # then one MXU matmul: (TB,186)bf16 @ (186,168)bf16 with f32 accumulation.
    x_bf = x_ref[...].astype(jnp.bfloat16)
    y = jnp.dot(x_bf, w_ref[...], preferred_element_type=jnp.float32)
    # Bias add in f32 on the VPU (v5e's VPU has no bf16 ALU), cast to out dtype.
    o_ref[...] = (y + b_ref[...]).astype(o_ref.dtype)


def fuse_params(w1, b1, w2, b2):
    """Eval-time algebraic fusion of fc2(dropout(fc1(x))).

    dropout(p=0.5) is identity in eval mode and both layers are affine, so
        y = (x @ w1 + b1) @ w2 + b2 = x @ (w1 @ w2) + (b1 @ w2 + b2).
    Fused weight is cast to bf16 (native MXU path); fused bias stays f32.
    NOTE: this fusion is NOT valid for training-mode forward.
    """
    w1f = w1.astype(jnp.float32)
    w2f = w2.astype(jnp.float32)
    w_fused = (w1f @ w2f).astype(jnp.bfloat16)                       # (186, 168) bf16
    b_fused = b1.astype(jnp.float32) @ w2f + b2.astype(jnp.float32)  # (1, 168) f32
    return w_fused, b_fused


def model_forward(x, w_fused, b_fused):
    """x: (B, 186) f32. Returns (B, 168) f32 == fc2(dropout(fc1(x))) in eval mode."""
    B = x.shape[0]

    # Tile selection: if the whole batch fits in one tile, use the full batch
    # dim (always a legal block shape). Otherwise use TB_MAX (multiple of 8);
    # Pallas masks the ragged last block (OOB reads padded, OOB writes dropped).
    tb = B if B <= TB_MAX else TB_MAX
    grid = (pl.cdiv(B, tb),)

    cost = pl.CostEstimate(
        flops=2 * B * D_IN * D_OUT,
        transcendentals=0,
        bytes_accessed=(B * D_IN * 4          # x (f32 in)
                        + D_IN * D_OUT * 2    # fused weight (bf16)
                        + D_OUT * 4           # fused bias (f32)
                        + B * D_OUT * 4),     # output (f32)
    )

    out = pl.pallas_call(
        fused_mlp_kernel,
        out_shape=jax.ShapeDtypeStruct((B, D_OUT), jnp.float32),
        grid_spec=pltpu.PrefetchScalarGridSpec(
            num_scalar_prefetch=0,
            grid=grid,
            in_specs=[
                # Batch tile streams in f32 (double-buffered by the pipeline).
                pl.BlockSpec((tb, D_IN), lambda i: (i, 0)),
                # Constant index_map -> fused weight/bias stay VMEM-resident
                # across all grid iterations.
                pl.BlockSpec((D_IN, D_OUT), lambda i: (0, 0)),
                pl.BlockSpec((1, D_OUT), lambda i: (0, 0)),
            ],
            out_specs=pl.BlockSpec((tb, D_OUT), lambda i: (i, 0)),
        ),
        compiler_params=pltpu.CompilerParams(
            # Batch tiles are independent -> shard across both TensorCores on
            # v7x (harmless on single-TC v5e/v6e).
            dimension_semantics=("parallel",),
        ),
        cost_estimate=cost,
    )(x, w_fused, b_fused)

    return out


def init_params(key):
    """Deterministic init matching nn.Linear's default
    U(-1/sqrt(fan_in), 1/sqrt(fan_in)) for both weights and biases.
    Weights are stored [in_features, out_features]."""
    k1, k2, k3, k4 = jax.random.split(key, 4)
    bound1 = 1.0 / math.sqrt(D_IN)
    bound2 = 1.0 / math.sqrt(D_HID)
    w1 = jax.random.uniform(k1, (D_IN, D_HID), jnp.float32, -bound1, bound1)
    b1 = jax.random.uniform(k2, (1, D_HID), jnp.float32, -bound1, bound1)
    w2 = jax.random.uniform(k3, (D_HID, D_OUT), jnp.float32, -bound2, bound2)
    b2 = jax.random.uniform(k4, (1, D_OUT), jnp.float32, -bound2, bound2)
    return w1, b1, w2, b2


if __name__ == "__main__":
    key = jax.random.PRNGKey(0)
    k_x, k_p = jax.random.split(key)

    B = 16
    x = jax.random.normal(k_x, (B, D_IN), jnp.float32)
    w1, b1, w2, b2 = init_params(k_p)

    # Precompute the fused/bf16 parameters once (eval-time constant folding).
    w_fused, b_fused = fuse_params(w1, b1, w2, b2)

    out = model_forward(x, w_fused, b_fused)
    out = jax.block_until_ready(out)
    assert out.shape == (B, D_OUT)

    # 1) Tight check against the same fused/bf16 math in plain JAX
    #    (kernel casts x to bf16 in-kernel; reference mirrors that rounding).
    ref_fused = (x.astype(jnp.bfloat16).astype(jnp.float32)
                 @ w_fused.astype(jnp.float32)) + b_fused
    assert jnp.allclose(out, ref_fused, atol=1e-4, rtol=1e-4)

    # 2) Loose check against the original two-layer f32 module math
    #    (bf16 inputs/weights -> ~1e-2 error; f32 accumulation keeps it bounded).
    ref_full = (x @ w1 + b1) @ w2 + b2
    assert jnp.allclose(out, ref_full, atol=3e-2, rtol=3e-2)

    print("KERNEL_OK")
</pallas_src>

<mosaic_0001>
module attributes {stable_mosaic.version = 11 : i64} {
  func.func @fused_mlp_kernel(%arg0: i32, %arg1: memref<16x186xf32, #tpu.memory_space<vmem>>, %arg2: memref<186x168xbf16, #tpu.memory_space<vmem>>, %arg3: memref<1x168xf32, #tpu.memory_space<vmem>>, %arg4: memref<16x168xf32, #tpu.memory_space<vmem>>) attributes {dimension_semantics = [#tpu.dimension_semantics<parallel>], iteration_bounds = array<i64: 1>, scalar_prefetch = 0 : i64, scratch_operands = 0 : i64, tpu.core_type = #tpu.core_type<tc>, window_params = [{transform_indices = @transform_0, window_bounds = array<i64: 16, 186>}, {pipeline_mode = #tpu.pipeline_mode<synchronous>, transform_indices = @transform_1, window_bounds = array<i64: 186, 168>}, {pipeline_mode = #tpu.pipeline_mode<synchronous>, transform_indices = @transform_2, window_bounds = array<i64: 1, 168>}, {transform_indices = @transform_3, window_bounds = array<i64: 16, 168>}]} {
    %c0 = arith.constant 0 : index
    %c0_0 = arith.constant 0 : index
    %0 = vector.load %arg1[%c0, %c0_0] : memref<16x186xf32, #tpu.memory_space<vmem>>, vector<16x186xf32>
    %1 = arith.truncf %0 : vector<16x186xf32> to vector<16x186xbf16>
    %c0_1 = arith.constant 0 : index
    %c0_2 = arith.constant 0 : index
    %2 = vector.load %arg2[%c0_1, %c0_2] : memref<186x168xbf16, #tpu.memory_space<vmem>>, vector<186x168xbf16>
    %cst = arith.constant dense<0.000000e+00> : vector<16x168xf32>
    %3 = tpu.matmul %1, %2, %cst {dimension_numbers = #tpu.dot_dimension_numbers<[1], [0], [0], [1], [0, 0, 1, 1], [], []>} : vector<16x186xbf16>, vector<186x168xbf16>, vector<16x168xf32> -> vector<16x168xf32>
    %c0_3 = arith.constant 0 : index
    %c0_4 = arith.constant 0 : index
    %4 = vector.load %arg3[%c0_3, %c0_4] : memref<1x168xf32, #tpu.memory_space<vmem>>, vector<1x168xf32>
    %5 = vector.broadcast %4 : vector<1x168xf32> to vector<16x168xf32>
    %6 = arith.addf %3, %5 : vector<16x168xf32>
    %c0_5 = arith.constant 0 : index
    %c0_6 = arith.constant 0 : index
    %7 = vector.load %arg4[%c0_5, %c0_6] : memref<16x168xf32, #tpu.memory_space<vmem>>, vector<16x168xf32>
    tpu.vector_store %arg4[%c0_5, %c0_6], %6 {strides = array<i32>} : memref<16x168xf32, #tpu.memory_space<vmem>>, vector<16x168xf32>,
    return
  }
  func.func @transform_0(%arg0: i32) -> (i32, i32) {
    %c0_i32 = arith.constant 0 : i32
    %c0_i32_0 = arith.constant 0 : i32
    return %arg0, %c0_i32 : i32, i32
  }
  func.func @transform_1(%arg0: i32) -> (i32, i32) {
    %c0_i32 = arith.constant 0 : i32
    %c0_i32_0 = arith.constant 0 : i32
    %c0_i32_1 = arith.constant 0 : i32
    return %c0_i32, %c0_i32_0 : i32, i32
  }
  func.func @transform_2(%arg0: i32) -> (i32, i32) {
    %c0_i32 = arith.constant 0 : i32
    %c0_i32_0 = arith.constant 0 : i32
    %c0_i32_1 = arith.constant 0 : i32
    return %c0_i32, %c0_i32_0 : i32, i32
  }
  func.func @transform_3(%arg0: i32) -> (i32, i32) {
    %c0_i32 = arith.constant 0 : i32
    %c0_i32_0 = arith.constant 0 : i32
    return %arg0, %c0_i32 : i32, i32
  }
}

</mosaic_0001>

<llo_original>
// kernel: tpu_custom_call.1
$region0: #{tpu_custom_call.1}
  #allocation0 [shape = 'u32[]', space=smem, size = 0x4, offset = 0x4, fixed_abs, tag = 'smem constant byte address 0x4 - core index']
  #allocation1 [shape = 'u32[144,128]{1,0:T(1,128)}', space=vmem, size = 0x12000, scoped, tag = 'internal scratch']
  %s0 = inlined_call_operand.vmem [shape: f32[16,186], index: 0, kind: input, shape index: {}]
  %s1 = inlined_call_operand.vmem [shape: bf16[186,168], index: 1, kind: input, shape index: {}]
  %s2 = inlined_call_operand.vmem [shape: f32[1,168], index: 2, kind: input, shape index: {}]
  %s3 = inlined_call_operand.hbm [shape: f32[16,168], index: 3, kind: output, shape index: {}]
  %s4 = sld [smem:[#allocation0]]
  $region22: #{tpu_custom_call.1} parent=0
    _
  %s6 = ssub.s32 1, %s4
  %s7 = scalar_select 0, %s6, %s4
  $region1: #{tpu_custom_call.1} parent=0
    #allocation2 [shape = 'u8[16384]{0}', space=vmem, size = 0x4000, scoped, tag = 'output window, operand 0, single buffered']
    #allocation3 [shape = 's32[1]{0}', space=sflag, size = 0x4, scoped, tag = 'scoped memory for tpu_custom_call.1']
    %8 = vsyncpa [#allocation3], 0
    // Predicated region
    $region2: #{tpu_custom_call.1} parent=1 // pred_check
      _
    $region3: #{tpu_custom_call.1} parent=1 // pred_check_branch
      %10 = sbr.rel (0) target = $region5
    $region4: #{tpu_custom_call.1} parent=1 // pred_region
      _
    $region5: #{tpu_custom_call.1} parent=1 // pred_fallthru
      _
    // Predicated region
    $region6: #{tpu_custom_call.1} parent=1 // pred_check
      _
    $region7: #{tpu_custom_call.1} parent=1 // pred_check_branch
      %12 = sbr.rel (0) target = $region9
    $region8: #{tpu_custom_call.1} parent=1 // pred_region
      _
    $region9: #{tpu_custom_call.1} parent=1 // pred_fallthru
      _
    // Predicated region
    $region10: #{tpu_custom_call.1} parent=1 // pred_check
      _
    $region11: #{tpu_custom_call.1} parent=1 // pred_check_branch
      %14 = sbr.rel (0) target = $region13
    $region12: #{tpu_custom_call.1} parent=1 // pred_region
      _
    $region13: #{tpu_custom_call.1} parent=1 // pred_fallthru
      _
    %v16 = vld [vmem:[%s0] sm:$0xff]
    %v17 = vld [vmem:[%s0 + $0x8] sm:$0xff]
    %v18 = vld [vmem:[%s0 + $0x10] sm:$0xff]
    %v19 = vld [vmem:[%s0 + $0x18] sm:$0xff]
    %v20 = vpack.c.bf16 %v18, %v16
    %v21 = vpack.c.bf16 %v19, %v17
    %v22 = vld [vmem:[%s1] sm:$0xff]
    %v23 = vld [vmem:[%s1 + $0x8] sm:$0xff]
    %v24 = vld [vmem:[%s1 + $0x10] sm:$0xff]
    %v25 = vld [vmem:[%s1 + $0x18] sm:$0xff]
    %v26 = vld [vmem:[%s1 + $0x20] sm:$0xff]
    %v27 = vld [vmem:[%s1 + $0x28] sm:$0xff]
    %v28 = vld [vmem:[%s1 + $0x30] sm:$0xff]
    %v29 = vld [vmem:[%s1 + $0x38] sm:$0xff]
    %v30 = vld [vmem:[%s1 + $0x40] sm:$0xff]
    %v31 = vld [vmem:[%s1 + $0x48] sm:$0xff]
    %v32 = vld [vmem:[%s1 + $0x50] sm:$0xff]
    %v33 = vld [vmem:[%s1 + $0x58] sm:$0xff]
    %v34 = vld [vmem:[%s1 + $0x60] sm:$0xff]
    %v35 = vld [vmem:[%s1 + $0x68] sm:$0xff]
    %v36 = vld [vmem:[%s1 + $0x70] sm:$0xff]
    %v37 = vld [vmem:[%s1 + $0x78] sm:$0xff]
    %v38 = vld [vmem:[%s1 + $0x80] sm:$0xff]
    %v39 = vld [vmem:[%s1 + $0x88] sm:$0xff]
    %v40 = vld [vmem:[%s1 + $0x90] sm:$0xff]
    %v41 = vld [vmem:[%s1 + $0x98] sm:$0xff]
    %v42 = vld [vmem:[%s1 + $0xa0] sm:$0xff]
    %v43 = vld [vmem:[%s1 + $0xa8] sm:$0xff]
    %v44 = vld [vmem:[%s1 + $0xb0] sm:$0xff]
    %v45 = vld [vmem:[%s1 + $0xb8] sm:$0x11]
    %v46 = vld [vmem:[%s2] sm:$0x3]
    %v48 = vlaneseq
    %v49 = vshrl.u32 %v48, 7
    %v50 = vsub.s32 0, %v49
    %v51 = vrot.slane %v46, %v50
    %v52 = vlaneseq
    %v53 = vshrl.u32 %v52, 7
    %v54 = vsub.s32 1, %v53
    %v55 = vrot.slane %v46, %v54
    %v82 = vunpack.c.l.b16 %v22
    %v83 = vunpack.c.h.b16 %v22
    %v84 = vunpack.c.l.b16 %v23
    %v85 = vunpack.c.h.b16 %v23
    %v86 = vunpack.c.l.b16 %v24
    %v87 = vunpack.c.h.b16 %v24
    %v88 = vunpack.c.l.b16 %v25
    %v89 = vunpack.c.h.b16 %v25
    %v90 = vunpack.c.l.b16 %v26
    %v91 = vunpack.c.h.b16 %v26
    %v92 = vunpack.c.l.b16 %v27
    %v93 = vunpack.c.h.b16 %v27
    %v94 = vunpack.c.l.b16 %v28
    %v95 = vunpack.c.h.b16 %v28
    %v96 = vunpack.c.l.b16 %v29
    %v97 = vunpack.c.h.b16 %v29
    %v98 = vunpack.c.l.b16 %v30
    %v99 = vunpack.c.h.b16 %v30
    %v100 = vunpack.c.l.b16 %v31
    %v101 = vunpack.c.h.b16 %v31
    %v102 = vunpack.c.l.b16 %v32
    %v103 = vunpack.c.h.b16 %v32
    %v104 = vunpack.c.l.b16 %v33
    %v105 = vunpack.c.h.b16 %v33
    %v106 = vunpack.c.l.b16 %v34
    %v107 = vunpack.c.h.b16 %v34
    %v108 = vunpack.c.l.b16 %v35
    %v109 = vunpack.c.h.b16 %v35
    %v110 = vunpack.c.l.b16 %v36
    %v111 = vunpack.c.h.b16 %v36
    %v112 = vunpack.c.l.b16 %v37
    %v113 = vunpack.c.h.b16 %v37
    %v114 = vunpack.c.l.b16 %v38
    %v115 = vunpack.c.h.b16 %v38
    %v116 = vunpack.c.l.b16 %v39
    %v117 = vunpack.c.h.b16 %v39
    %v118 = vunpack.c.l.b16 %v40
    %v119 = vunpack.c.h.b16 %v40
    %v120 = vunpack.c.l.b16 %v41
    %v121 = vunpack.c.h.b16 %v41
    %v122 = vunpack.c.l.b16 %v42
    %v123 = vunpack.c.h.b16 %v42
    %v124 = vunpack.c.l.b16 %v43
    %v125 = vunpack.c.h.b16 %v43
    %v126 = vunpack.c.l.b16 %v44
    %v127 = vunpack.c.h.b16 %v44
    %v128 = vunpack.c.l.b16 %v45
    %v129 = vunpack.c.h.b16 %v45
    %v130 = vpack.c.b16 %v84, %v82
    %v131 = vpack.c.b16 %v85, %v83
    %v132 = vpack.c.b16 %v88, %v86
    %v133 = vpack.c.b16 %v89, %v87
    %v134 = vpack.c.b16 %v92, %v90
    %v135 = vpack.c.b16 %v93, %v91
    %v136 = vpack.c.b16 %v96, %v94
    %v137 = vpack.c.b16 %v97, %v95
    %v138 = vpack.c.b16 %v100, %v98
    %v139 = vpack.c.b16 %v101, %v99
    %v140 = vpack.c.b16 %v104, %v102
    %v141 = vpack.c.b16 %v105, %v103
    %v142 = vpack.c.b16 %v108, %v106
    %v143 = vpack.c.b16 %v109, %v107
    %v144 = vpack.c.b16 %v112, %v110
    %v145 = vpack.c.b16 %v113, %v111
    %v146 = vpack.c.b16 %v116, %v114
    %v147 = vpack.c.b16 %v117, %v115
    %v148 = vpack.c.b16 %v120, %v118
    %v149 = vpack.c.b16 %v121, %v119
    %v150 = vpack.c.b16 %v124, %v122
    %v151 = vpack.c.b16 %v125, %v123
    %v152 = vpack.c.b16 %v128, %v126
    %v153 = vpack.c.b16 %v129, %v127
    %vm176 = vcmask 474112
    %v178 = vsel %vm176, %v21, 0
    %vm180 = vcmask 1044480
    %v182 = vsel %vm180, %v152, 0
    %v185 = vsel %vm180, %v153, 0
    %187 = vmatprep.subr.bf16.mxu0 %v131
    %188 = vmatpush1.bf16.msra.mxu0 %v130
    %189 = vmatprep.subr.bf16.mxu0 %v133
    %190 = vmatpush1.bf16.msra.mxu0 %v132
    %191 = vmatprep.subr.bf16.mxu0 %v135
    %192 = vmatpush1.bf16.msra.mxu0 %v134
    %193 = vmatprep.subr.bf16.mxu0 %v137
    %194 = vmatpush1.bf16.msra.mxu0 %v136
    %195 = vmatprep.subr.bf16.mxu0 %v139
    %196 = vmatpush1.bf16.msra.mxu0 %v138
    %197 = vmatprep.subr.bf16.mxu0 %v141
    %198 = vmatpush1.bf16.msra.mxu0 %v140
    %199 = vmatprep.subr.bf16.mxu0 %v143
    %200 = vmatpush1.bf16.msra.mxu0 %v142
    %201 = vmatprep.subr.bf16.mxu0 %v145
    %202 = vmatpush1.bf16.msra.mxu0 %v144
    %203 = vmatprep.subr.bf16.mxu0 %v147
    %204 = vmatpush1.bf16.msra.mxu0 %v146
    %205 = vmatprep.subr.bf16.mxu0 %v149
    %206 = vmatpush1.bf16.msra.mxu0 %v148
    %207 = vmatprep.subr.bf16.mxu0 %v151
    %208 = vmatpush1.bf16.msra.mxu0 %v150
    %209 = vmatprep.subr.bf16.mxu0 %v185
    %210 = vmatpush1.bf16.msra.mxu0 %v182
    %211 = vmatprep.subr.bf16.mxu0 0
    %212 = vmatpush1.bf16.msra.mxu0 0
    %213 = vmatprep.subr.bf16.mxu0 0
    %214 = vmatpush1.bf16.msra.mxu0 0
    %215 = vmatprep.subr.bf16.mxu0 0
    %216 = vmatpush1.bf16.msra.mxu0 0
    %217 = vmatprep.subr.bf16.mxu0 0
    %218 = vmatpush1.bf16.msra.mxu0 0
    %219 = vmatprep.mubr.bf16.mxu0 %v178
    %220 = vmatmul.mubr.bf16.gmra.mrb[0].mxu0 %v20
    %v221 = vpop.f32.mrb[0].mxu0
    %v222 = vadd.f32 %v51, %v221
    %v223 = vpop.f32.mrb[0].mxu0
    %v224 = vadd.f32 %v55, %v223
    %v225 = vpop.f32.mrb[0].mxu0
    %v226 = vadd.f32 %v51, %v225
    %v227 = vpop.f32.mrb[0].mxu0
    %v228 = vadd.f32 %v55, %v227
    %229 = vdwg.mxu0
    %230 = vst [vmem:[#allocation2] sm:$0xff] %v222
    %vm231 = vcmask 326656
    %232 = vst.msk [vmem:[#allocation2 + $0x8] sm:$0xff] %vm231, %v224
    %233 = vst [vmem:[#allocation2 + $0x10] sm:$0xff] %v226
    %234 = vst.msk [vmem:[#allocation2 + $0x18] sm:$0xff] %vm231, %v228
    // Predicated region
    $region14: #{tpu_custom_call.1} parent=1 // pred_check
      _
    $region15: #{tpu_custom_call.1} parent=1 // pred_check_branch
      %236 = sbr.rel (0) target = $region17
    $region16: #{tpu_custom_call.1} parent=1 // pred_region
      %s238 = ssub.s32 512, 512
      %239 = vsyncadd [#allocation3], %s238
      %s240 = sshll.u32 [#allocation2], 4
      %s241 = int_to_ptr.vmem [resolvable:$true] %s240
      %246 = dma.vmem_to_hbm [thread:$0]  %s241, 512, %s3, [#allocation3], 256, 256, 16
    $region17: #{tpu_custom_call.1} parent=1 // pred_fallthru
      _
    // Predicated region
    $region18: #{tpu_custom_call.1} parent=1 // pred_check
      _
    $region19: #{tpu_custom_call.1} parent=1 // pred_check_branch
      %248 = sbr.rel (0) target = $region21
    $region20: #{tpu_custom_call.1} parent=1 // pred_region
      %249 = dma.done [#allocation3], 512
    $region21: #{tpu_custom_call.1} parent=1 // pred_fallthru
      _
    %250 = vsyncpa [#allocation3], 1

</llo_original>
